<compile_context>
chip_gen: v7x
topology: tpu7x:2x2x1
jax: 0.10.0
libtpu: 0.0.40
codegen_flags: <defaults>
</compile_context>

<pallas_src>
import functools

import jax
import jax.numpy as jnp
from jax.experimental import pallas as pl
from jax.experimental.pallas import tpu as pltpu


def _vmem_capacity_bytes():
    try:
        return int(pltpu.get_tpu_info().vmem_capacity_bytes)
    except Exception:
        return 64 * 1024 * 1024  # conservative fallback (v7x per-core VMEM)


def _round_up(a, b):
    return -(-a // b) * b


# ---------------------------------------------------------------------------
# Fast path: whole array resident in VMEM, single (un-pipelined) buffer.
# ---------------------------------------------------------------------------
def _fused_kernel(x_ref, o_ref, *, value_range):
    x = x_ref[...].astype(jnp.float32)
    x_min_sub = x - jnp.min(x)
    scale = value_range / jnp.max(x_min_sub)   # div-by-0 hazard, as in PyTorch
    o_ref[...] = (x_min_sub * scale).astype(o_ref.dtype)


# ---------------------------------------------------------------------------
# Pass 1 (large inputs): per-core global min/max partials.
#   grid = (2, nb_half); outer axis "parallel" (both v7x TCs), inner axis is
#   the sequential reduction.  Rows past the end of the array (partial last
#   block, or the clamped duplicate block of an odd split) are masked +/-inf.
# ---------------------------------------------------------------------------
def _minmax_kernel(x_ref, pmin_ref, pmax_ref, accmin_ref, accmax_ref,
                   *, rows, tm):
    c = pl.program_id(0)
    i = pl.program_id(1)
    nb_half = pl.num_programs(1)

    x = x_ref[...].astype(jnp.float32)
    lane = x.shape[1]

    blk = c * nb_half + i                       # unclamped logical block index
    row = jax.lax.broadcasted_iota(jnp.int32, x.shape, 0)
    valid = row < (rows - blk * tm)
    xmin = jnp.where(valid, x, jnp.inf)
    xmax = jnp.where(valid, x, -jnp.inf)

    # Layout-preserving sublane split: element-wise (VPU-only) folds per tile.
    tile_min = jnp.min(xmin.reshape(tm // 8, 8, lane), axis=0)
    tile_max = jnp.max(xmax.reshape(tm // 8, 8, lane), axis=0)

    @pl.when(i == 0)
    def _():
        accmin_ref[...] = tile_min
        accmax_ref[...] = tile_max

    @pl.when(i > 0)
    def _():
        accmin_ref[...] = jnp.minimum(accmin_ref[...], tile_min)
        accmax_ref[...] = jnp.maximum(accmax_ref[...], tile_max)

    # One cross-lane/sublane reduction per core, at its last grid step.
    @pl.when(i == nb_half - 1)
    def _():
        pmin_ref[...] = jnp.full(pmin_ref.shape, jnp.min(accmin_ref[...]),
                                 jnp.float32)
        pmax_ref[...] = jnp.full(pmax_ref.shape, jnp.max(accmax_ref[...]),
                                 jnp.float32)


# ---------------------------------------------------------------------------
# Pass 2 (large inputs): element-wise rescale.  Combines the two per-core
# partials with a handful of scalar SMEM ops per step (no host epilogue).
# ---------------------------------------------------------------------------
def _scale_kernel(pmin_ref, pmax_ref, x_ref, o_ref, *, value_range):
    mn = jnp.minimum(pmin_ref[0, 0], pmin_ref[8, 0])
    mx = jnp.maximum(pmax_ref[0, 0], pmax_ref[8, 0])
    scale = value_range / (mx - mn)             # div-by-0 hazard, as in PyTorch
    o_ref[...] = ((x_ref[...].astype(jnp.float32) - mn) * scale).astype(o_ref.dtype)


def scale_dynamic_range(x, scaler_bounds=(0.0, 1.0), *, fast_path_bytes=None):
    """Pallas implementation of ScaleDynamicRange.forward (any shape/dtype)."""
    value_range = float(scaler_bounds[1] - scaler_bounds[0])
    orig_shape = x.shape
    orig_dtype = x.dtype
    itemsize = jnp.dtype(orig_dtype).itemsize
    sub_mult = {4: 8, 2: 16, 1: 32}.get(itemsize, 8)   # dtype-aware row rounding

    vmem_cap = _vmem_capacity_bytes()
    vmem_limit = min(int(vmem_cap * 0.9), 100 * 1024 * 1024)
    if fast_path_bytes is None:
        # Fused-path footprint ~= in + out (orig dtype) + one f32 temp.
        fast_path_bytes = vmem_cap // 2

    x_flat = x.reshape(-1)
    n_valid = x_flat.shape[0]
    n = n_valid

    if n % 128 != 0:
        # Rare fallback: pad with an existing element (min/max unaffected).
        # TODO(synk): large non-128-divisible inputs still pay one pad copy and
        # one output slice; typical image batches never hit this branch.
        n = _round_up(n, 512)
        x_flat = jnp.concatenate(
            [x_flat, jnp.full((n - n_valid,), x_flat[0], dtype=orig_dtype)])

    # Lane-dense 2D view (free reshape): last dim a multiple of 128; prefer
    # wide lanes while keeping >= 8 sublane rows.
    lane = 128
    for cand in (2048, 1024, 512, 256):
        if n % cand == 0 and n // cand >= 8:
            lane = cand
            break
    rows = n // lane
    x2 = x_flat.reshape(rows, lane)

    if n * (2 * itemsize + 4) <= fast_path_bytes:
        # ---------------- fused single pass (single-buffered, no grid) ------
        y2 = pl.pallas_call(
            functools.partial(_fused_kernel, value_range=value_range),
            out_shape=jax.ShapeDtypeStruct((rows, lane), orig_dtype),
            in_specs=[pl.BlockSpec(memory_space=pltpu.MemorySpace.VMEM)],
            out_specs=pl.BlockSpec(memory_space=pltpu.MemorySpace.VMEM),
            compiler_params=pltpu.CompilerParams(vmem_limit_bytes=vmem_limit),
        )(x2)
    else:
        # ---------------- two-pass path (large inputs) -----------------------
        tile_bytes = min(8 * 1024 * 1024, vmem_cap // 10)
        tm = max(sub_mult,
                 (tile_bytes // (lane * itemsize)) // sub_mult * sub_mult)
        tm = min(tm, _round_up(rows, sub_mult))
        nb = -(-rows // tm)            # total row-blocks
        nb_half = -(-nb // 2)          # per-core share (outer parallel axis = 2)

        def _x_map(c, i):
            # Clamp so the (possibly) duplicated final block of an odd split
            # stays in bounds; the kernel masks it via the unclamped index.
            return (jnp.minimum(c * nb_half + i, nb - 1), 0)

        pmin, pmax = pl.pallas_call(
            functools.partial(_minmax_kernel, rows=rows, tm=tm),
            out_shape=(jax.ShapeDtypeStruct((16, 128), jnp.float32),
                       jax.ShapeDtypeStruct((16, 128), jnp.float32)),
            grid=(2, nb_half),
            in_specs=[pl.BlockSpec((tm, lane), _x_map)],
            out_specs=(pl.BlockSpec((8, 128), lambda c, i: (c, 0)),
                       pl.BlockSpec((8, 128), lambda c, i: (c, 0))),
            scratch_shapes=[pltpu.VMEM((8, lane), jnp.float32),
                            pltpu.VMEM((8, lane), jnp.float32)],
            compiler_params=pltpu.CompilerParams(
                dimension_semantics=("parallel", "arbitrary"),
                vmem_limit_bytes=vmem_limit),
        )(x2)

        y2 = pl.pallas_call(
            functools.partial(_scale_kernel, value_range=value_range),
            out_shape=jax.ShapeDtypeStruct((rows, lane), orig_dtype),
            grid=(nb,),
            in_specs=[pl.BlockSpec(memory_space=pltpu.MemorySpace.SMEM),
                      pl.BlockSpec(memory_space=pltpu.MemorySpace.SMEM),
                      pl.BlockSpec((tm, lane), lambda i: (i, 0))],
            out_specs=pl.BlockSpec((tm, lane), lambda i: (i, 0)),
            compiler_params=pltpu.CompilerParams(
                dimension_semantics=("parallel",),
                vmem_limit_bytes=vmem_limit),
        )(pmin, pmax, x2)

    y_flat = y2.reshape(-1)
    if n != n_valid:
        y_flat = y_flat[:n_valid]
    return y_flat.reshape(orig_shape)


def _reference(x, scaler_bounds=(0.0, 1.0)):
    value_range = scaler_bounds[1] - scaler_bounds[0]
    x_min_sub = x - jnp.min(x)
    return x_min_sub * (value_range / jnp.max(x_min_sub))


if __name__ == "__main__":
    key = jax.random.PRNGKey(0)
    # Small NCHW image batch, consistent with an augmentation module.
    x = jax.random.normal(key, (2, 4, 16, 16), dtype=jnp.float32) * 3.0 + 1.5
    y_ref = _reference(x, (0.0, 1.0))

    # Fused single-pass path (input fits in VMEM, no pad since 2048 % 128 == 0).
    y = jax.block_until_ready(scale_dynamic_range(x, (0.0, 1.0)))
    assert y.shape == x.shape and y.dtype == x.dtype
    assert jnp.allclose(y, y_ref, atol=1e-5, rtol=1e-5), "fast path mismatch"
    assert jnp.isclose(jnp.min(y), 0.0, atol=1e-6)
    assert jnp.isclose(jnp.max(y), 1.0, atol=1e-6)

    # Force the tiled two-pass path on the same input (covers the dual-core
    # pass-1 split, +/-inf masking of the clamped duplicate block, and the
    # SMEM partial-scalar delivery into pass 2).
    y_two = jax.block_until_ready(
        scale_dynamic_range(x, (0.0, 1.0), fast_path_bytes=0))
    assert jnp.allclose(y_two, y_ref, atol=1e-5, rtol=1e-5), "two-pass mismatch"

    # Odd, non-128-divisible shape exercises the rare pad/slice fallback.
    x_odd = jax.random.uniform(jax.random.PRNGKey(1), (2, 3, 15, 17),
                               dtype=jnp.float32) * 5.0 - 2.0
    y_odd = jax.block_until_ready(scale_dynamic_range(x_odd, (0.0, 2.0)))
    assert jnp.allclose(y_odd, _reference(x_odd, (0.0, 2.0)),
                        atol=1e-5, rtol=1e-5), "odd-shape mismatch"

    # bf16 input exercises the dtype-aware path (f32 compute, bf16 in/out).
    x_bf = (jax.random.normal(jax.random.PRNGKey(2), (2, 4, 16, 16))
            * 2.0).astype(jnp.bfloat16)
    y_bf = jax.block_until_ready(scale_dynamic_range(x_bf, (0.0, 1.0)))
    ref_bf = _reference(x_bf.astype(jnp.float32), (0.0, 1.0)).astype(jnp.bfloat16)
    assert y_bf.dtype == jnp.bfloat16
    assert jnp.allclose(y_bf.astype(jnp.float32), ref_bf.astype(jnp.float32),
                        atol=2e-2, rtol=2e-2), "bf16 mismatch"

    print("KERNEL_OK")
</pallas_src>

<mosaic_0001>
module attributes {stable_mosaic.version = 11 : i64} {
  func.func @_fused_kernel(%arg0: memref<8x256xf32, #tpu.memory_space<vmem>>, %arg1: memref<8x256xf32, #tpu.memory_space<vmem>>) attributes {dimension_semantics = [], scalar_prefetch = 0 : i64, scratch_operands = 0 : i64, tpu.core_type = #tpu.core_type<tc>} {
    %c0 = arith.constant 0 : index
    %c0_0 = arith.constant 0 : index
    %0 = vector.load %arg0[%c0, %c0_0] : memref<8x256xf32, #tpu.memory_space<vmem>>, vector<8x256xf32>
    %1 = vector.shape_cast %0 : vector<8x256xf32> to vector<1x8x256xf32>
    %cst = arith.constant dense<0x7F800000> : vector<1xf32>
    %2 = vector.multi_reduction <minimumf>, %1, %cst [1, 2] : vector<1x8x256xf32> to vector<1xf32>
    %3 = vector.shape_cast %2 : vector<1xf32> to vector<1x1x1xf32>
    %4 = vector.extract %3[0, 0, 0] : f32 from vector<1x1x1xf32>
    %5 = vector.broadcast %4 : f32 to vector<8x256xf32>
    %6 = arith.subf %0, %5 : vector<8x256xf32>
    %7 = vector.shape_cast %6 : vector<8x256xf32> to vector<1x8x256xf32>
    %cst_1 = arith.constant dense<0xFF800000> : vector<1xf32>
    %8 = vector.multi_reduction <maximumf>, %7, %cst_1 [1, 2] : vector<1x8x256xf32> to vector<1xf32>
    %9 = vector.shape_cast %8 : vector<1xf32> to vector<1x1x1xf32>
    %10 = vector.extract %9[0, 0, 0] : f32 from vector<1x1x1xf32>
    %cst_2 = arith.constant 1.000000e+00 : f32
    %11 = arith.divf %cst_2, %10 : f32
    %12 = vector.broadcast %11 : f32 to vector<8x256xf32>
    %13 = arith.mulf %6, %12 : vector<8x256xf32>
    %c0_3 = arith.constant 0 : index
    %c0_4 = arith.constant 0 : index
    %14 = vector.load %arg1[%c0_3, %c0_4] : memref<8x256xf32, #tpu.memory_space<vmem>>, vector<8x256xf32>
    tpu.vector_store %arg1[%c0_3, %c0_4], %13 {strides = array<i32>} : memref<8x256xf32, #tpu.memory_space<vmem>>, vector<8x256xf32>,
    return
  }
}

</mosaic_0001>

<llo_original>
// kernel: tpu_custom_call.1
$region0: #{tpu_custom_call.1}
  #allocation0 [shape = 'u32[]', space=smem, size = 0x4, offset = 0x4, fixed_abs, tag = 'smem constant byte address 0x4 - core index']
  #allocation1 [shape = 'u32[144,128]{1,0:T(1,128)}', space=vmem, size = 0x12000, scoped, tag = 'internal scratch']
  %s0 = inlined_call_operand.hbm [shape: f32[8,256], index: 0, kind: input, shape index: {}]
  %s1 = inlined_call_operand.hbm [shape: f32[8,256], index: 1, kind: output, shape index: {}]
  %s2 = sld [smem:[#allocation0]]
  $region18: #{tpu_custom_call.1} parent=0
    _
  %s4 = ssub.s32 1, %s2
  %s5 = scalar_select 0, %s4, %s2
  $region1: #{tpu_custom_call.1} parent=0
    #allocation2 [shape = 'u8[8192]{0}', space=vmem, size = 0x2000, scoped, tag = 'input window, operand 0, single buffered']
    #allocation3 [shape = 's32[1]{0}', space=sflag, size = 0x4, scoped, tag = 'scoped memory for tpu_custom_call.1']
    #allocation4 [shape = 's32[1]{0}', space=sflag, size = 0x4, scoped, tag = 'scoped memory for tpu_custom_call.1']
    #allocation5 [shape = 'u8[8192]{0}', space=vmem, size = 0x2000, scoped, tag = 'output window, operand 0, single buffered']
    %6 = vsyncpa [#allocation3], 0
    %7 = vsyncpa [#allocation4], 0
    // Predicated region
    $region2: #{tpu_custom_call.1} parent=1 // pred_check
      _
    $region3: #{tpu_custom_call.1} parent=1 // pred_check_branch
      %9 = sbr.rel (0) target = $region5
    $region4: #{tpu_custom_call.1} parent=1 // pred_region
      %s11 = ssub.s32 256, 256
      %12 = vsyncadd [#allocation3], %s11
      %s14 = sshll.u32 [#allocation2], 4
      %s15 = int_to_ptr.vmem [resolvable:$true] %s14
      %17 = dma.hbm_to_vmem [thread:$0]  %s0, 256, %s15, [#allocation3]
    $region5: #{tpu_custom_call.1} parent=1 // pred_fallthru
      _
    // Predicated region
    $region6: #{tpu_custom_call.1} parent=1 // pred_check
      _
    $region7: #{tpu_custom_call.1} parent=1 // pred_check_branch
      %19 = sbr.rel (0) target = $region9
    $region8: #{tpu_custom_call.1} parent=1 // pred_region
      %20 = dma.done [#allocation3], 256
    $region9: #{tpu_custom_call.1} parent=1 // pred_fallthru
      _
    %v21 = vld [vmem:[#allocation2] sm:$0xff]
    %v22 = vld [vmem:[#allocation2 + $0x8] sm:$0xff]
    %v23 = vmin.f32 %v21, %v22
    %24 = vmin.xlane.f32.xlu0 %v23
    %v25 = vpop.xlane.xlu0 %24
    %v26 = vrot.slane %v25, 4
    %v27 = vmin.f32 %v25, %v26
    %v28 = vrot.slane %v27, 2
    %v29 = vmin.f32 %v27, %v28
    %v30 = vrot.slane %v29, 1
    %v31 = vmin.f32 %v29, %v30
    %s32 = vtos %v31
    %v33 = vstv %s32
    %v34 = vsub.f32 %v21, %v33
    %v35 = vsub.f32 %v22, %v33
    %v36 = vmax.f32 %v34, %v35
    %37 = vmax.xlane.f32.xlu0 %v36
    %v38 = vpop.xlane.xlu0 %37
    %v39 = vrot.slane %v38, 4
    %v40 = vmax.f32 %v38, %v39
    %v41 = vrot.slane %v40, 2
    %v42 = vmax.f32 %v40, %v41
    %v43 = vrot.slane %v42, 1
    %v44 = vmax.f32 %v42, %v43
    %s45 = vtos %v44
    %v46 = vstv %s45
    %v47 = vrcp.pop %v46
    %s48 = vtos %v47
    %v49 = vstv %s48
    %v50 = vmul.f32 %v34, %v49
    %v51 = vmul.f32 %v35, %v49
    %52 = vst [vmem:[#allocation5] sm:$0xff] %v50
    %53 = vst [vmem:[#allocation5 + $0x8] sm:$0xff] %v51
    // Predicated region
    $region10: #{tpu_custom_call.1} parent=1 // pred_check
      _
    $region11: #{tpu_custom_call.1} parent=1 // pred_check_branch
      %55 = sbr.rel (0) target = $region13
    $region12: #{tpu_custom_call.1} parent=1 // pred_region
      %s57 = ssub.s32 256, 256
      %58 = vsyncadd [#allocation4], %s57
      %s60 = sshll.u32 [#allocation5], 4
      %s61 = int_to_ptr.vmem [resolvable:$true] %s60
      %63 = dma.vmem_to_hbm [thread:$0]  %s61, 256, %s1, [#allocation4]
    $region13: #{tpu_custom_call.1} parent=1 // pred_fallthru
      _
    // Predicated region
    $region14: #{tpu_custom_call.1} parent=1 // pred_check
      _
    $region15: #{tpu_custom_call.1} parent=1 // pred_check_branch
      %65 = sbr.rel (0) target = $region17
    $region16: #{tpu_custom_call.1} parent=1 // pred_region
      %66 = dma.done [#allocation4], 256
    $region17: #{tpu_custom_call.1} parent=1 // pred_fallthru
      _
    %67 = vsyncpa [#allocation3], 1
    %68 = vsyncpa [#allocation4], 1

</llo_original>
